<compile_context>
chip_gen: v6e
topology: v6e:2x2x1
jax: 0.10.0
libtpu: 0.0.40
codegen_flags: <defaults>
</compile_context>

<pallas_src>
import functools

import jax
import jax.numpy as jnp
from jax import lax
from jax.experimental import pallas as pl
from jax.experimental.pallas import tpu as pltpu


# ---------------------------------------------------------------------------
# Fast path: "three-hot" MXU matmul (token + instruction + argument) + LN
# ---------------------------------------------------------------------------
def _threehot_ln_kernel(idx_ref,    # (1, tS, 4) int32: [tok, V+instr, V+P+arg, 0]
                        tab_ref,    # (W, H) merged [token; instr; arg] table (VMEM)
                        gamma_ref,  # (1, H) f32
                        beta_ref,   # (1, H) f32
                        out_ref,    # (1, tS, H) out dtype
                        *, eps):
    tS = idx_ref.shape[1]
    W = tab_ref.shape[0]

    idx = idx_ref[0]                                           # (tS, 4) int32
    lane = lax.broadcasted_iota(jnp.int32, (tS, W), 1)         # lane-dense
    hot = ((lane == idx[:, 0:1]) | (lane == idx[:, 1:2]) |
           (lane == idx[:, 2:3])).astype(tab_ref.dtype)
    # token + instruction + argument embeddings in ONE MXU matmul (f32 accum).
    x = jnp.dot(hot, tab_ref[...], preferred_element_type=jnp.float32)  # (tS, H)

    # Fused LayerNorm, E[x^2] - E[x]^2 form (fewer live (tS, H) temporaries).
    mean = jnp.mean(x, axis=-1, keepdims=True)
    mean2 = jnp.mean(x * x, axis=-1, keepdims=True)
    var = jnp.maximum(mean2 - mean * mean, 0.0)
    y = (x - mean) * lax.rsqrt(var + eps)
    y = y * gamma_ref[...] + beta_ref[...]
    # TODO(synk): dropout omitted (eval-mode identity).
    out_ref[...] = y[None].astype(out_ref.dtype)


# ---------------------------------------------------------------------------
# Gather path: double-buffered DMA token gather + two-hot pos matmul + LN
# ---------------------------------------------------------------------------
def _gather_ln_kernel(ids_smem,     # (B, S) int32, SMEM (scalar prefetch)
                      pos_idx_ref,  # (1, tS, 4) int32: [instr, P+arg, 0, 0]
                      tok_hbm,      # (V, H) token table, native dtype, HBM (ANY)
                      pos_tab_ref,  # (2P, H) merged positional table (VMEM)
                      gamma_ref,    # (1, H) f32
                      beta_ref,     # (1, H) f32
                      out_ref,      # (1, tS, H)
                      tok_buf,      # scratch (2*tS, H), token dtype (double buffer)
                      sems,         # scratch (2,) DMA semaphores
                      *, eps):
    tS = pos_idx_ref.shape[1]
    b = pl.program_id(0)
    s = pl.program_id(1)
    n_s = pl.num_programs(1)
    slot = s % 2

    def issue(tile, dst_slot):
        base = tile * tS
        row0 = dst_slot * tS

        def body(j, carry):
            tok_id = ids_smem[b, base + j]
            pltpu.make_async_copy(tok_hbm.at[pl.ds(tok_id, 1)],
                                  tok_buf.at[pl.ds(row0 + j, 1)],
                                  sems.at[dst_slot]).start()
            return carry

        lax.fori_loop(0, tS, body, 0, unroll=8)

    # Prologue: first tile of this batch row gathers for itself.
    @pl.when(s == 0)
    def _():
        issue(s, slot)

    # Cross-step prefetch: gather the NEXT tile's token rows into the other
    # slot while this tile computes (ids already sit in SMEM).
    @pl.when(s + 1 < n_s)
    def _():
        issue(s + 1, 1 - slot)

    # Positional embeddings: one "two-hot" MXU matmul (overlaps the DMAs).
    pidx = pos_idx_ref[0]                                      # (tS, 4) int32
    P2 = pos_tab_ref.shape[0]
    lane = lax.broadcasted_iota(jnp.int32, (tS, P2), 1)
    hot = ((lane == pidx[:, 0:1]) | (lane == pidx[:, 1:2])).astype(pos_tab_ref.dtype)
    pos_emb = jnp.dot(hot, pos_tab_ref[...], preferred_element_type=jnp.float32)

    # ONE aggregate wait covering the whole (tS, H) gather of the current slot:
    # every per-row copy signalled sems[slot] with H*itemsize bytes, and this
    # descriptor's byte count is exactly tS * H * itemsize.
    start = slot * tS
    if tS % 8 == 0:
        start = pl.multiple_of(start, 8)
    pltpu.make_async_copy(tok_hbm.at[pl.ds(0, tS)],
                          tok_buf.at[pl.ds(start, tS)],
                          sems.at[slot]).wait()

    x = tok_buf[pl.ds(start, tS), :].astype(jnp.float32) + pos_emb

    mean = jnp.mean(x, axis=-1, keepdims=True)
    mean2 = jnp.mean(x * x, axis=-1, keepdims=True)
    var = jnp.maximum(mean2 - mean * mean, 0.0)
    y = (x - mean) * lax.rsqrt(var + eps)
    y = y * gamma_ref[...] + beta_ref[...]
    # TODO(synk): dropout omitted (eval-mode identity).
    out_ref[...] = y[None].astype(out_ref.dtype)


# ---------------------------------------------------------------------------
# Wrapper
# ---------------------------------------------------------------------------
def _pick_seq_tile(S, row_bytes, override=None):
    if override is not None:
        if S % override != 0:
            raise ValueError("seq_tile must divide the sequence length")
        return override
    budget = 4 << 20                       # dominant per-tile working set cap
    for cand in (2048, 1024, 512, 256, 128, 64, 32, 16, 8):
        if S % cand == 0 and cand * row_bytes <= budget:
            return cand
    return S                               # small / ragged S: one tile per row


def instruction_trace_position_embedding(input_ids, next_token_id,
                                         token_table, instr_table, arg_table,
                                         gamma, beta, eps=1e-12,
                                         out_dtype=None, seq_tile=None,
                                         fast_table_max_bytes=4 << 20,
                                         force_gather=False):
    """Forward pass of InstructionTracePositionEmbedding. Returns (B, S, H)."""
    if input_ids.ndim == 1:
        input_ids = input_ids[None, :]
    B, S = input_ids.shape
    V, H = token_table.shape
    P = instr_table.shape[0]

    # ---------------- index glue: instruction / argument position ids --------
    # torch.roll(x, 1) flattens, rolls by 1, restores shape; column 0 then False.
    is_next = input_ids == next_token_id
    starts = jnp.roll(is_next.reshape(-1), 1).reshape(B, S)
    starts = starts.at[:, 0].set(False)
    instructions = jnp.cumsum(starts.astype(jnp.int32), axis=-1)          # (B, S)
    pos = jnp.arange(S, dtype=jnp.int32)
    seg_start = lax.cummax(jnp.where(starts, pos[None, :], 0), axis=1)
    arguments = pos[None, :] - seg_start                                  # (B, S)

    # NOTE: PyTorch nn.Embedding raises on OOB indices; we clamp instead.
    ids_c = jnp.clip(input_ids.astype(jnp.int32), 0, V - 1)
    ins_c = jnp.clip(instructions, 0, P - 1)
    arg_c = jnp.clip(arguments, 0, P - 1)

    if out_dtype is None:
        out_dtype = jnp.result_type(token_table.dtype, instr_table.dtype,
                                    arg_table.dtype)
    out_bytes = jnp.dtype(out_dtype).itemsize
    gamma2 = gamma.reshape(1, H).astype(jnp.float32)
    beta2 = beta.reshape(1, H).astype(jnp.float32)
    zeros = jnp.zeros((B, S), jnp.int32)

    token_bytes = V * H * token_table.dtype.itemsize
    use_fast = (not force_gather) and token_bytes <= fast_table_max_bytes

    if use_fast:
        # -------- fast path: merged (V+2P, H) table, single three-hot matmul --
        tab_dtype = jnp.result_type(token_table.dtype, instr_table.dtype,
                                    arg_table.dtype)
        merged = jnp.concatenate([token_table.astype(tab_dtype),
                                  instr_table.astype(tab_dtype),
                                  arg_table.astype(tab_dtype)], axis=0)   # (V+2P, H)
        W = ((V + 2 * P + 127) // 128) * 128
        if W != V + 2 * P:
            merged = jnp.pad(merged, ((0, W - (V + 2 * P)), (0, 0)))
        idx = jnp.stack([ids_c, V + ins_c, V + P + arg_c, zeros], axis=-1)

        tS = _pick_seq_tile(S, 4 * W + 24 * H, seq_tile)
        n_s = S // tS

        est = (2 * tS * 4 * 4                       # idx block (double-buffered)
               + 2 * W * H * merged.dtype.itemsize  # merged table
               + 2 * tS * H * out_bytes             # output block (double-buffered)
               + tS * W * 4                         # three-hot intermediate
               + 5 * tS * H * 4                     # f32 LN temporaries
               + 4 * 8 * H * 4)                     # gamma/beta (sublane padded)
        vmem_limit = int(min(40 << 20, max(8 << 20, 2 * est)))

        grid_spec = pltpu.PrefetchScalarGridSpec(
            num_scalar_prefetch=0,
            grid=(B, n_s),
            in_specs=[
                pl.BlockSpec((1, tS, 4), lambda b, s: (b, s, 0)),
                pl.BlockSpec((W, H), lambda b, s: (0, 0)),
                pl.BlockSpec((1, H), lambda b, s: (0, 0)),
                pl.BlockSpec((1, H), lambda b, s: (0, 0)),
            ],
            out_specs=pl.BlockSpec((1, tS, H), lambda b, s: (b, s, 0)),
        )
        return pl.pallas_call(
            functools.partial(_threehot_ln_kernel, eps=eps),
            out_shape=jax.ShapeDtypeStruct((B, S, H), out_dtype),
            grid_spec=grid_spec,
            compiler_params=pltpu.CompilerParams(
                dimension_semantics=("parallel", "parallel"),
                vmem_limit_bytes=vmem_limit),
        )(idx, merged, gamma2, beta2)

    # -------------------- gather path: large vocabulary -----------------------
    tS = _pick_seq_tile(S, 32 * H, seq_tile)
    n_s = S // tS
    assert V >= tS, "gather path requires vocab_size >= sequence tile"

    pos_dtype = jnp.result_type(instr_table.dtype, arg_table.dtype)
    pos_table = jnp.concatenate([instr_table.astype(pos_dtype),
                                 arg_table.astype(pos_dtype)], axis=0)     # (2P, H)
    pos_idx = jnp.stack([ins_c, P + arg_c, zeros, zeros], axis=-1)         # (B,S,4)

    est = (2 * tS * 4 * 4
           + 2 * 2 * P * H * pos_table.dtype.itemsize
           + 2 * tS * H * out_bytes                       # output block
           + 2 * tS * H * token_table.dtype.itemsize      # tok_buf (2 slots)
           + 5 * tS * H * 4                               # f32 temporaries
           + 4 * 8 * H * 4)
    vmem_limit = int(min(40 << 20, max(8 << 20, 2 * est)))

    # TODO(synk): when B == 1 there is no "parallel" axis left for v7x's two
    # TensorCores; an outer-parallel / inner-arbitrary split of S would fix it.
    grid_spec = pltpu.PrefetchScalarGridSpec(
        num_scalar_prefetch=1,                 # token ids -> SMEM (drives gather)
        grid=(B, n_s),
        in_specs=[
            pl.BlockSpec((1, tS, 4), lambda b, s, ids: (b, s, 0)),
            pl.BlockSpec(memory_space=pl.ANY),                 # token table (HBM)
            pl.BlockSpec((2 * P, H), lambda b, s, ids: (0, 0)),
            pl.BlockSpec((1, H), lambda b, s, ids: (0, 0)),
            pl.BlockSpec((1, H), lambda b, s, ids: (0, 0)),
        ],
        out_specs=pl.BlockSpec((1, tS, H), lambda b, s, ids: (b, s, 0)),
        scratch_shapes=[
            pltpu.VMEM((2 * tS, H), token_table.dtype),   # 2-slot gather buffer
            pltpu.SemaphoreType.DMA((2,)),                # one semaphore per slot
        ],
    )
    return pl.pallas_call(
        functools.partial(_gather_ln_kernel, eps=eps),
        out_shape=jax.ShapeDtypeStruct((B, S, H), out_dtype),
        grid_spec=grid_spec,
        compiler_params=pltpu.CompilerParams(
            dimension_semantics=("parallel", "arbitrary"),
            vmem_limit_bytes=vmem_limit),
    )(ids_c, pos_idx, token_table, pos_table, gamma2, beta2)


# ---------------------------------------------------------------------------
# Pure-JAX reference (mirrors the PyTorch forward, dropout = identity)
# ---------------------------------------------------------------------------
def _reference(input_ids, next_token_id, token_table, instr_table, arg_table,
               gamma, beta, eps=1e-12):
    if input_ids.ndim == 1:
        input_ids = input_ids[None, :]
    B, S = input_ids.shape
    V = token_table.shape[0]
    P = instr_table.shape[0]
    is_next = input_ids == next_token_id
    starts = jnp.roll(is_next.reshape(-1), 1).reshape(B, S)
    starts = starts.at[:, 0].set(False)
    instructions = jnp.cumsum(starts.astype(jnp.int32), axis=-1)
    pos = jnp.arange(S, dtype=jnp.int32)
    seg_start = lax.cummax(jnp.where(starts, pos[None, :], 0), axis=1)
    arguments = pos[None, :] - seg_start
    ids_c = jnp.clip(input_ids.astype(jnp.int32), 0, V - 1)
    ins_c = jnp.clip(instructions, 0, P - 1)
    arg_c = jnp.clip(arguments, 0, P - 1)
    x = (token_table[ids_c].astype(jnp.float32)
         + instr_table[ins_c].astype(jnp.float32)
         + arg_table[arg_c].astype(jnp.float32))
    mean = x.mean(-1, keepdims=True)
    var = ((x - mean) ** 2).mean(-1, keepdims=True)
    return (x - mean) * lax.rsqrt(var + eps) * gamma + beta


if __name__ == "__main__":
    B, S, H = 2, 16, 128
    VOCAB, MAX_POS, NEXT = 64, 16, 3
    EPS = 1e-12

    key = jax.random.PRNGKey(0)
    k_ids, k_tok, k_ins, k_arg, k_ids2 = jax.random.split(key, 5)

    input_ids = jax.random.randint(k_ids, (B, S), 0, VOCAB, dtype=jnp.int32)
    input_ids = input_ids.at[0, 2].set(NEXT).at[0, 9].set(NEXT)
    input_ids = input_ids.at[1, 5].set(NEXT).at[1, 11].set(NEXT)

    token_table = jax.random.normal(k_tok, (VOCAB, H), dtype=jnp.float32)
    instr_table = jax.random.normal(k_ins, (MAX_POS, H), dtype=jnp.float32)
    arg_table = jax.random.normal(k_arg, (MAX_POS, H), dtype=jnp.float32)
    gamma = jnp.ones((H,), dtype=jnp.float32)
    beta = jnp.zeros((H,), dtype=jnp.float32)

    ref = _reference(input_ids, NEXT, token_table, instr_table, arg_table,
                     gamma, beta, eps=EPS)

    # --- 1. fast (three-hot) path, f32 output ---------------------------------
    out = instruction_trace_position_embedding(
        input_ids, NEXT, token_table, instr_table, arg_table, gamma, beta, eps=EPS)
    out = jax.block_until_ready(out)
    assert out.shape == (B, S, H) and out.dtype == jnp.float32
    assert jnp.allclose(out, ref, rtol=1e-4, atol=1e-4), "fast path mismatch"

    # --- 2. fast path, bf16 activation output ---------------------------------
    out_bf = instruction_trace_position_embedding(
        input_ids, NEXT, token_table, instr_table, arg_table, gamma, beta,
        eps=EPS, out_dtype=jnp.bfloat16)
    out_bf = jax.block_until_ready(out_bf)
    assert out_bf.dtype == jnp.bfloat16
    assert jnp.allclose(out_bf.astype(jnp.float32), ref, rtol=3e-2, atol=3e-2), \
        "bf16 output mismatch"

    # --- 3. forced gather path (large-vocab code path), bf16 native table,
    #        2 sequence tiles so the cross-step double-buffer is exercised ------
    S2, V2 = 256, 512
    ids2 = jax.random.randint(k_ids2, (B, S2), 0, V2, dtype=jnp.int32)
    ids2 = ids2.at[0, 3].set(NEXT).at[0, 40].set(NEXT).at[1, 7].set(NEXT)
    tok2 = jax.random.normal(k_tok, (V2, H), dtype=jnp.float32).astype(jnp.bfloat16)
    out2 = instruction_trace_position_embedding(
        ids2, NEXT, tok2, instr_table, arg_table, gamma, beta, eps=EPS,
        force_gather=True, seq_tile=128)
    out2 = jax.block_until_ready(out2)
    ref2 = _reference(ids2, NEXT, tok2, instr_table, arg_table, gamma, beta, eps=EPS)
    assert out2.shape == (B, S2, H)
    assert jnp.allclose(out2.astype(jnp.float32), ref2, rtol=1e-4, atol=1e-4), \
        "gather path mismatch"

    print("KERNEL_OK")
</pallas_src>

<mosaic_0001>
module attributes {stable_mosaic.version = 11 : i64} {
  func.func @_threehot_ln_kernel(%arg0: i32, %arg1: i32, %arg2: memref<1x16x4xi32, #tpu.memory_space<vmem>>, %arg3: memref<128x128xf32, #tpu.memory_space<vmem>>, %arg4: memref<1x128xf32, #tpu.memory_space<vmem>>, %arg5: memref<1x128xf32, #tpu.memory_space<vmem>>, %arg6: memref<1x16x128xf32, #tpu.memory_space<vmem>>) attributes {dimension_semantics = [#tpu.dimension_semantics<parallel>, #tpu.dimension_semantics<parallel>], iteration_bounds = array<i64: 2, 1>, scalar_prefetch = 0 : i64, scratch_operands = 0 : i64, tpu.core_type = #tpu.core_type<tc>, window_params = [{transform_indices = @transform_0, window_bounds = array<i64: 1, 16, 4>}, {pipeline_mode = #tpu.pipeline_mode<synchronous>, transform_indices = @transform_1, window_bounds = array<i64: 128, 128>}, {pipeline_mode = #tpu.pipeline_mode<synchronous>, transform_indices = @transform_2, window_bounds = array<i64: 1, 128>}, {pipeline_mode = #tpu.pipeline_mode<synchronous>, transform_indices = @transform_3, window_bounds = array<i64: 1, 128>}, {transform_indices = @transform_4, window_bounds = array<i64: 1, 16, 128>}]} {
    %c0 = arith.constant 0 : index
    %c0_0 = arith.constant 0 : index
    %c0_1 = arith.constant 0 : index
    %0 = vector.load %arg2[%c0, %c0_0, %c0_1] : memref<1x16x4xi32, #tpu.memory_space<vmem>>, vector<1x16x4xi32>
    %1 = vector.shape_cast %0 : vector<1x16x4xi32> to vector<16x4xi32>
    %2 = tpu.iota {dimensions = array<i32: 1>} : vector<16x128xi32>
    %3 = vector.extract_strided_slice %1 {offsets = [0, 0], sizes = [16, 1], strides = [1, 1]} : vector<16x4xi32> to vector<16x1xi32>
    %4 = vector.broadcast %3 : vector<16x1xi32> to vector<16x128xi32>
    %5 = arith.cmpi eq, %2, %4 : vector<16x128xi32>
    %6 = vector.extract_strided_slice %1 {offsets = [0, 1], sizes = [16, 1], strides = [1, 1]} : vector<16x4xi32> to vector<16x1xi32>
    %7 = vector.broadcast %6 : vector<16x1xi32> to vector<16x128xi32>
    %8 = arith.cmpi eq, %2, %7 : vector<16x128xi32>
    %9 = arith.ori %5, %8 : vector<16x128xi1>
    %10 = vector.extract_strided_slice %1 {offsets = [0, 2], sizes = [16, 1], strides = [1, 1]} : vector<16x4xi32> to vector<16x1xi32>
    %11 = vector.broadcast %10 : vector<16x1xi32> to vector<16x128xi32>
    %12 = arith.cmpi eq, %2, %11 : vector<16x128xi32>
    %13 = arith.ori %9, %12 : vector<16x128xi1>
    %14 = arith.extui %13 : vector<16x128xi1> to vector<16x128xi32>
    %15 = arith.sitofp %14 : vector<16x128xi32> to vector<16x128xf32>
    %c0_2 = arith.constant 0 : index
    %c0_3 = arith.constant 0 : index
    %16 = vector.load %arg3[%c0_2, %c0_3] : memref<128x128xf32, #tpu.memory_space<vmem>>, vector<128x128xf32>
    %cst = arith.constant dense<0.000000e+00> : vector<16x128xf32>
    %17 = tpu.matmul %15, %16, %cst {dimension_numbers = #tpu.dot_dimension_numbers<[1], [0], [0], [1], [0, 0, 1, 1], [], []>} : vector<16x128xf32>, vector<128x128xf32>, vector<16x128xf32> -> vector<16x128xf32>
    %cst_4 = arith.constant dense<0.000000e+00> : vector<16xf32>
    %18 = vector.multi_reduction <add>, %17, %cst_4 [1] : vector<16x128xf32> to vector<16xf32>
    %19 = vector.shape_cast %18 : vector<16xf32> to vector<16x1xf32>
    %cst_5 = arith.constant 1.280000e+02 : f32
    %20 = vector.broadcast %cst_5 : f32 to vector<16x1xf32>
    %21 = arith.divf %19, %20 : vector<16x1xf32>
    %22 = arith.mulf %17, %17 : vector<16x128xf32>
    %cst_6 = arith.constant dense<0.000000e+00> : vector<16xf32>
    %23 = vector.multi_reduction <add>, %22, %cst_6 [1] : vector<16x128xf32> to vector<16xf32>
    %24 = vector.shape_cast %23 : vector<16xf32> to vector<16x1xf32>
    %cst_7 = arith.constant 1.280000e+02 : f32
    %25 = vector.broadcast %cst_7 : f32 to vector<16x1xf32>
    %26 = arith.divf %24, %25 : vector<16x1xf32>
    %27 = arith.mulf %21, %21 : vector<16x1xf32>
    %28 = arith.subf %26, %27 : vector<16x1xf32>
    %cst_8 = arith.constant 0.000000e+00 : f32
    %29 = vector.broadcast %cst_8 : f32 to vector<16x1xf32>
    %30 = arith.maximumf %28, %29 : vector<16x1xf32>
    %31 = vector.broadcast %21 : vector<16x1xf32> to vector<16x128xf32>
    %32 = arith.subf %17, %31 : vector<16x128xf32>
    %cst_9 = arith.constant 9.99999996E-13 : f32
    %33 = vector.broadcast %cst_9 : f32 to vector<16x1xf32>
    %34 = arith.addf %30, %33 : vector<16x1xf32>
    %35 = math.rsqrt %34 : vector<16x1xf32>
    %36 = vector.broadcast %35 : vector<16x1xf32> to vector<16x128xf32>
    %37 = arith.mulf %32, %36 : vector<16x128xf32>
    %c0_10 = arith.constant 0 : index
    %c0_11 = arith.constant 0 : index
    %38 = vector.load %arg4[%c0_10, %c0_11] : memref<1x128xf32, #tpu.memory_space<vmem>>, vector<1x128xf32>
    %39 = vector.broadcast %38 : vector<1x128xf32> to vector<16x128xf32>
    %40 = arith.mulf %37, %39 : vector<16x128xf32>
    %c0_12 = arith.constant 0 : index
    %c0_13 = arith.constant 0 : index
    %41 = vector.load %arg5[%c0_12, %c0_13] : memref<1x128xf32, #tpu.memory_space<vmem>>, vector<1x128xf32>
    %42 = vector.broadcast %41 : vector<1x128xf32> to vector<16x128xf32>
    %43 = arith.addf %40, %42 : vector<16x128xf32>
    %44 = vector.shape_cast %43 : vector<16x128xf32> to vector<1x16x128xf32>
    %c0_14 = arith.constant 0 : index
    %c0_15 = arith.constant 0 : index
    %c0_16 = arith.constant 0 : index
    %45 = vector.load %arg6[%c0_14, %c0_15, %c0_16] : memref<1x16x128xf32, #tpu.memory_space<vmem>>, vector<1x16x128xf32>
    tpu.vector_store %arg6[%c0_14, %c0_15, %c0_16], %44 {strides = array<i32>} : memref<1x16x128xf32, #tpu.memory_space<vmem>>, vector<1x16x128xf32>,
    return
  }
  func.func @transform_0(%arg0: i32, %arg1: i32) -> (i32, i32, i32) {
    %c0_i32 = arith.constant 0 : i32
    %c0_i32_0 = arith.constant 0 : i32
    return %arg0, %arg1, %c0_i32 : i32, i32, i32
  }
  func.func @transform_1(%arg0: i32, %arg1: i32) -> (i32, i32) {
    %c0_i32 = arith.constant 0 : i32
    %c0_i32_0 = arith.constant 0 : i32
    %c0_i32_1 = arith.constant 0 : i32
    return %c0_i32, %c0_i32_0 : i32, i32
  }
  func.func @transform_2(%arg0: i32, %arg1: i32) -> (i32, i32) {
    %c0_i32 = arith.constant 0 : i32
    %c0_i32_0 = arith.constant 0 : i32
    %c0_i32_1 = arith.constant 0 : i32
    return %c0_i32, %c0_i32_0 : i32, i32
  }
  func.func @transform_3(%arg0: i32, %arg1: i32) -> (i32, i32) {
    %c0_i32 = arith.constant 0 : i32
    %c0_i32_0 = arith.constant 0 : i32
    %c0_i32_1 = arith.constant 0 : i32
    return %c0_i32, %c0_i32_0 : i32, i32
  }
  func.func @transform_4(%arg0: i32, %arg1: i32) -> (i32, i32, i32) {
    %c0_i32 = arith.constant 0 : i32
    %c0_i32_0 = arith.constant 0 : i32
    return %arg0, %arg1, %c0_i32 : i32, i32, i32
  }
}

</mosaic_0001>

<llo_original>
// kernel: tpu_custom_call.1
$region0: #{tpu_custom_call.1}
  #allocation0 [shape = 'u32[]', space=smem, size = 0x4, offset = 0x4, fixed_abs, tag = 'smem constant byte address 0x4 - core index']
  #allocation1 [shape = 'u32[144,128]{1,0:T(1,128)}', space=vmem, size = 0x12000, scoped, tag = 'internal scratch']
  %s0 = inlined_call_operand.vmem [shape: s32[2,16,4], index: 0, kind: input, shape index: {}]
  %s1 = inlined_call_operand.hbm [shape: f32[128,128], index: 1, kind: input, shape index: {}]
  %s2 = inlined_call_operand.vmem [shape: f32[1,128], index: 2, kind: input, shape index: {}]
  %s3 = inlined_call_operand.vmem [shape: f32[1,128], index: 3, kind: input, shape index: {}]
  %s4 = inlined_call_operand.hbm [shape: f32[2,16,128], index: 4, kind: output, shape index: {}]
  %s5 = sld [smem:[#allocation0]]
  $region53: #{tpu_custom_call.1} parent=0
    _
  %s7 = ssub.s32 1, %s5
  %s8 = scalar_select 0, %s7, %s5
  $region1: #{tpu_custom_call.1} parent=0
    #allocation2 [shape = 'u8[65536]{0}', space=vmem, size = 0x10000, scoped, tag = 'input window, operand 1, single buffered']
    #allocation3 [shape = 's32[2]{0}', space=sflag, size = 0x8, scoped, tag = 'scoped memory for tpu_custom_call.1']
    #allocation4 [shape = 's32[2]{0}', space=sflag, size = 0x8, scoped, tag = 'scoped memory for tpu_custom_call.1']
    #allocation5 [shape = 'u8[16384]{0}', space=vmem, size = 0x4000, scoped, tag = 'output window, operand 0']
    %9 = vsyncpa [#allocation3], 0
    %10 = vsyncpa [#allocation4], 0
    %s11 = scalar_lea.sflag [#allocation4], 1
    %12 = vsyncpa %s11, 0
    loop: start=0, step=1, limit=4
    $region2: #{tpu_custom_call.1} parent=1 // loop_pre_header
      _
    $region3: #{tpu_custom_call.1} parent=1 // loop_header
      %s14 = sphi 0, %s18
      %p15 = scmp.ge.s32.totalorder %s14, 4
      %s21 = sphi 0, %s33
      %s22 = sphi 0, %s29
      %s23 = sphi 0, %s21
      %s24 = sphi 0, %s22
      %s25 = sphi 0, %s23
      %s26 = sphi 0, %s24
      %s38 = sphi 0, %s40
      %s41 = sphi 0, %s38
      %s42 = sphi 0, %s41
      %s58 = sphi 0, %s42
      %s62 = sphi 0, %s62
      %s64 = sphi 0, %s62
      %s65 = sphi 0, %s64
      %s79 = sphi 0, %s65
      %s83 = sphi 0, %s83
      %s85 = sphi 0, %s83
      %s86 = sphi 0, %s85
      %s100 = sphi 0, %s86
      %s104 = sphi 0, %s104
      %s106 = sphi 0, %s104
      %s107 = sphi 0, %s106
      %s121 = sphi 0, %s107
      %s129 = sphi 0, %s131
      %s132 = sphi 0, %s129
      %s133 = sphi 0, %s132
      %s149 = sphi 0, %s133
    $region4: #{tpu_custom_call.1} parent=1 // loop_header_branch
      %17 = sbr.rel (%p15) target = $region8
    $region5: #{tpu_custom_call.1} parent=1 // loop_body
      %s19 = ssub.s32 %s14, 1
      %s20 = ssub.s32 %s14, 2
      %s27 = sadd.s32 1, %s22
      %p28 = scmp.ge.s32.totalorder %s27, 1
      %s29 = scalar_select %p28, 0, %s27
      %s30 = sadd.s32 1, %s21
      %s31 = scalar_select %p28, %s30, %s21
      %p32 = scmp.ge.s32.totalorder %s31, 2
      %s33 = scalar_select %p32, 0, %s31
      %s34 = ssub.s32 %s21, %s33
      %s35 = ssub.s32 %s22, %s29
      %s36 = sor.u32 %s34, %s35
      %p37 = scmp.eq.s32.totalorder %s36, 0
      %s39 = sadd.s32 %s38, 1
      %s40 = scalar_select %p37, %s38, %s39
      %p43 = pneg %p37
      %p44 = scmp.eq.s32.totalorder %s14, 1
      %p45 = por %p43, %p44
      %p46 = scmp.ne.s32.totalorder %s38, %s41
      %p47 = scmp.eq.s32.totalorder %s14, 0
      %p48 = por %p46, %p47
      %p49 = scmp.ne.s32.totalorder %s38, %s41
      %p50 = scmp.eq.s32.totalorder %s19, 1
      %p51 = por %p49, %p50
      %p52 = scmp.ne.s32.totalorder %s41, %s42
      %p53 = scmp.eq.s32.totalorder %s19, 0
      %p54 = por %p52, %p53
      %p55 = scmp.ne.s32.totalorder %s41, %s42
      %p56 = scmp.eq.s32.totalorder %s20, 1
      %p57 = por %p55, %p56
      %p59 = scmp.ne.s32.totalorder %s42, %s58
      %p60 = scmp.eq.s32.totalorder %s20, 0
      %p61 = por %p59, %p60
      %s63 = sadd.s32 %s62, 1
      %p66 = scmp.eq.s32.totalorder %s14, 1
      %p67 = scmp.ne.s32.totalorder %s62, %s64
      %p68 = scmp.eq.s32.totalorder %s14, 0
      %p69 = por %p67, %p68
      %p70 = scmp.ne.s32.totalorder %s62, %s64
      %p71 = scmp.eq.s32.totalorder %s19, 1
      %p72 = por %p70, %p71
      %p73 = scmp.ne.s32.totalorder %s64, %s65
      %p74 = scmp.eq.s32.totalorder %s19, 0
      %p75 = por %p73, %p74
      %p76 = scmp.ne.s32.totalorder %s64, %s65
      %p77 = scmp.eq.s32.totalorder %s20, 1
      %p78 = por %p76, %p77
      %p80 = scmp.ne.s32.totalorder %s65, %s79
      %p81 = scmp.eq.s32.totalorder %s20, 0
      %p82 = por %p80, %p81
      %s84 = sadd.s32 %s83, 1
      %p87 = scmp.eq.s32.totalorder %s14, 1
      %p88 = scmp.ne.s32.totalorder %s83, %s85
      %p89 = scmp.eq.s32.totalorder %s14, 0
      %p90 = por %p88, %p89
      %p91 = scmp.ne.s32.totalorder %s83, %s85
      %p92 = scmp.eq.s32.totalorder %s19, 1
      %p93 = por %p91, %p92
      %p94 = scmp.ne.s32.totalorder %s85, %s86
      %p95 = scmp.eq.s32.totalorder %s19, 0
      %p96 = por %p94, %p95
      %p97 = scmp.ne.s32.totalorder %s85, %s86
      %p98 = scmp.eq.s32.totalorder %s20, 1
      %p99 = por %p97, %p98
      %p101 = scmp.ne.s32.totalorder %s86, %s100
      %p102 = scmp.eq.s32.totalorder %s20, 0
      %p103 = por %p101, %p102
      %s105 = sadd.s32 %s104, 1
      %p108 = scmp.eq.s32.totalorder %s14, 1
      %p109 = scmp.ne.s32.totalorder %s104, %s106
      %p110 = scmp.eq.s32.totalorder %s14, 0
      %p111 = por %p109, %p110
      %p112 = scmp.ne.s32.totalorder %s104, %s106
      %p113 = scmp.eq.s32.totalorder %s19, 1
      %p114 = por %p112, %p113
      %p115 = scmp.ne.s32.totalorder %s106, %s107
      %p116 = scmp.eq.s32.totalorder %s19, 0
      %p117 = por %p115, %p116
      %p118 = scmp.ne.s32.totalorder %s106, %s107
      %p119 = scmp.eq.s32.totalorder %s20, 1
      %p120 = por %p118, %p119
      %p122 = scmp.ne.s32.totalorder %s107, %s121
      %p123 = scmp.eq.s32.totalorder %s20, 0
      %p124 = por %p122, %p123
      %s125 = ssub.s32 %s21, %s33
      %s126 = ssub.s32 %s22, %s29
      %s127 = sor.u32 %s125, %s126
      %p128 = scmp.eq.s32.totalorder %s127, 0
      %s130 = sadd.s32 %s129, 1
      %s131 = scalar_select %p128, %s129, %s130
      %p134 = pneg %p128
      %p135 = scmp.eq.s32.totalorder %s14, 1
      %p136 = por %p134, %p135
      %p137 = scmp.ne.s32.totalorder %s129, %s132
      %p138 = scmp.eq.s32.totalorder %s14, 0
      %p139 = por %p137, %p138
      %p140 = scmp.ne.s32.totalorder %s129, %s132
      %p141 = scmp.eq.s32.totalorder %s19, 1
      %p142 = por %p140, %p141
      %p143 = scmp.ne.s32.totalorder %s132, %s133
      %p144 = scmp.eq.s32.totalorder %s19, 0
      %p145 = por %p143, %p144
      %p146 = scmp.ne.s32.totalorder %s132, %s133
      %p147 = scmp.eq.s32.totalorder %s20, 1
      %p148 = por %p146, %p147
      %p150 = scmp.ne.s32.totalorder %s133, %s149
      %p151 = scmp.eq.s32.totalorder %s20, 0
      %p152 = por %p150, %p151
      %p153 = scmp.le.s32.totalorder 1, %s14
      %p154 = scmp.lt.s32.totalorder %s14, 3
      %p155 = pnand %p153, %p154
      %p156 = pneg %p155
      // Predicated region
      $region9: #{tpu_custom_call.1} parent=5 // pred_check
        _
      $region10: #{tpu_custom_call.1} parent=5 // pred_check_branch
        %158 = sbr.rel (%p155) target = $region12
      $region11: #{tpu_custom_call.1} parent=5 // pred_region
        %s159 = ssub.s32 %s14, 1
        // Predicated region
        $region13: #{tpu_custom_call.1} parent=11 // pred_check
          %p160 = pneg %p75
        $region14: #{tpu_custom_call.1} parent=11 // pred_check_branch
          %162 = sbr.rel (%p160) target = $region16
        $region15: #{tpu_custom_call.1} parent=11 // pred_region
          %s164 = ssub.s32 2048, 2048
          %165 = vsyncadd [#allocation3], %s164
          %s166 = sshll.u32 [#allocation2], 4
          %s167 = int_to_ptr.vmem [resolvable:$true] %s166
          %172 = dma.hbm_to_vmem [thread:$0]  %s1, 2048, %s167, [#allocation3], 128, 128, 8
        $region16: #{tpu_custom_call.1} parent=11 // pred_fallthru
          _
        // Predicated region
        $region17: #{tpu_custom_call.1} parent=11 // pred_check
          %p173 = pneg %p96
        $region18: #{tpu_custom_call.1} parent=11 // pred_check_branch
          %175 = sbr.rel (%p173) target = $region20
        $region19: #{tpu_custom_call.1} parent=11 // pred_region
          _
        $region20: #{tpu_custom_call.1} parent=11 // pred_fallthru
          _
        // Predicated region
        $region21: #{tpu_custom_call.1} parent=11 // pred_check
          %p176 = pneg %p117
        $region22: #{tpu_custom_call.1} parent=11 // pred_check_branch
          %178 = sbr.rel (%p176) target = $region24
        $region23: #{tpu_custom_call.1} parent=11 // pred_region
          _
        $region24: #{tpu_custom_call.1} parent=11 // pred_fallthru
          _
      $region12: #{tpu_custom_call.1} parent=5 // pred_fallthru
        _
      %p179 = scmp.lt.s32.totalorder %s14, 2
      // Predicated region
      $region25: #{tpu_custom_call.1} parent=5 // pred_check
        %p180 = pneg %p179
      $region26: #{tpu_custom_call.1} parent=5 // pred_check_branch
        %182 = sbr.rel (%p180) target = $region28
      $region27: #{tpu_custom_call.1} parent=5 // pred_region
        // Predicated region
        $region29: #{tpu_custom_call.1} parent=27 // pred_check
          %p183 = pneg %p48
        $region30: #{tpu_custom_call.1} parent=27 // pred_check_branch
          %185 = sbr.rel (%p183) target = $region32
        $region31: #{tpu_custom_call.1} parent=27 // pred_region
          %s186 = smul.u32 2, %s22
          %p187 = scmp.lt.s32.totalorder %s21, 1
          %s188 = scalar_select %p187, %s21, 1
          %p189 = scmp.lt.s32.totalorder %s186, 1
          %s190 = scalar_select %p189, %s186, 1
          %s191 = smul.addr %s188, 2
          %s192 = sadd.s32 %s190, %s191
          %s193 = smul.addr %s192, 8
          %s194 = scalar_lea.vmem %s0, %s193
          %s195 = smul.u32 2, %s22
        $region32: #{tpu_custom_call.1} parent=27 // pred_fallthru
          _
      $region28: #{tpu_custom_call.1} parent=5 // pred_fallthru
        _
      %p196 = scmp.le.s32.totalorder 1, %s14
      %p197 = scmp.lt.s32.totalorder %s14, 3
      %p198 = pnand %p196, %p197
      %p199 = pneg %p198
      // Predicated region
      $region33: #{tpu_custom_call.1} parent=5 // pred_check
        _
      $region34: #{tpu_custom_call.1} parent=5 // pred_check_branch
        %201 = sbr.rel (%p198) target = $region36
      $region35: #{tpu_custom_call.1} parent=5 // pred_region
        %s202 = ssub.s32 %s14, 1
        // Predicated region
        $region37: #{tpu_custom_call.1} parent=35 // pred_check
          %p203 = pneg %p75
        $region38: #{tpu_custom_call.1} parent=35 // pred_check_branch
          %205 = sbr.rel (%p203) target = $region40
        $region39: #{tpu_custom_call.1} parent=35 // pred_region
          %206 = dma.done [#allocation3], 2048
        $region40: #{tpu_custom_call.1} parent=35 // pred_fallthru
          _
        %s207 = smul.u32 2, %s24
        %p208 = scmp.lt.s32.totalorder %s23, 1
        %s209 = scalar_select %p208, %s23, 1
        %p210 = scmp.lt.s32.totalorder %s207, 1
        %s211 = scalar_select %p210, %s207, 1
        %s212 = smul.addr %s209, 2
        %s213 = sadd.s32 %s211, %s212
        %s214 = smul.addr %s213, 8
        %s215 = scalar_lea.vmem %s0, %s214
        %p216 = pneg %p54
        %p217 = pneg %p51
        %p218 = pneg %p75
        %p219 = pneg %p72
        %p220 = pneg %p96
        %p221 = pneg %p93
        %p222 = pneg %p117
        %p223 = pneg %p114
        %p224 = pneg %p145
        %p225 = pneg %p142
        %s226 = sand.u32 %s132, 1
        %s227 = scalar_lea.sflag [#allocation4], %s226
        %s228 = sand.u32 %s132, 1
        %s229 = smul.addr %s228, 16
        %s230 = scalar_lea.vmem [#allocation5], %s229
        %s231 = smul.u32 2, %s24
        %p232 = scmp.lt.s32.totalorder %s23, 1
        %s233 = scalar_select %p232, %s23, 1
        %p234 = scmp.lt.s32.totalorder %s231, 1
        %s235 = scalar_select %p234, %s231, 1
        %s236 = smul.addr %s233, 2
        %s237 = sadd.s32 %s235, %s236
        %s238 = smul.addr %s237, 8
        %s239 = scalar_lea.vmem %s0, %s238
        %s240 = smul.u32 2, %s24
        %s241 = smul.u32 2, %s24
        %v242 = vld [vmem:[%s239] sm:$0xff]
        %v243 = vld [vmem:[%s239 + $0x8] sm:$0xff]
        %v244 = vlaneseq
        %v245 = vand.u32 %v244, 127
        %246 = vset.pattern.permute.xlu0 0
        %247 = vperm.xlu0 %246, %v242
        %v248 = vpop.permute.xlu0 %247
        %249 = vset.pattern.permute.xlu0 0
        %250 = vperm.xlu0 %249, %v243
        %v251 = vpop.permute.xlu0 %250
        %vm252 = vcmp.eq.s32.totalorder %v245, %v248
        %vm253 = vcmp.eq.s32.totalorder %v245, %v251
        %254 = vset.pattern.permute.xlu0 1
        %255 = vperm.xlu0 %254, %v242
        %v256 = vpop.permute.xlu0 %255
        %257 = vset.pattern.permute.xlu0 1
        %258 = vperm.xlu0 %257, %v243
        %v259 = vpop.permute.xlu0 %258
        %vm260 = vcmp.eq.s32.totalorder %v245, %v256
        %vm261 = vcmp.eq.s32.totalorder %v245, %v259
        %vm262 = vmor %vm252, %vm260
        %vm263 = vmor %vm253, %vm261
        %264 = vset.pattern.permute.xlu0 2
        %265 = vperm.xlu0 %264, %v242
        %v266 = vpop.permute.xlu0 %265
        %267 = vset.pattern.permute.xlu0 2
        %268 = vperm.xlu0 %267, %v243
        %v269 = vpop.permute.xlu0 %268
        %vm270 = vcmp.eq.s32.totalorder %v245, %v266
        %vm271 = vcmp.eq.s32.totalorder %v245, %v269
        %vm272 = vmor %vm262, %vm270
        %vm273 = vmor %vm263, %vm271
        %v274 = vsel %vm272, 1, 0
        %v275 = vsel %vm273, 1, 0
        %v276 = vcvt.s32.f32 %v274
        %v277 = vcvt.s32.f32 %v275
        %v278 = vld [vmem:[#allocation2] sm:$0xff]
        %v279 = vld [vmem:[#allocation2 + $0x8] sm:$0xff]
        %v280 = vld [vmem:[#allocation2 + $0x10] sm:$0xff]
        %v281 = vld [vmem:[#allocation2 + $0x18] sm:$0xff]
        %v282 = vld [vmem:[#allocation2 + $0x20] sm:$0xff]
        %v283 = vld [vmem:[#allocation2 + $0x28] sm:$0xff]
        %v284 = vld [vmem:[#allocation2 + $0x30] sm:$0xff]
        %v285 = vld [vmem:[#allocation2 + $0x38] sm:$0xff]
        %v286 = vld [vmem:[#allocation2 + $0x40] sm:$0xff]
        %v287 = vld [vmem:[#allocation2 + $0x48] sm:$0xff]
        %v288 = vld [vmem:[#allocation2 + $0x50] sm:$0xff]
        %v289 = vld [vmem:[#allocation2 + $0x58] sm:$0xff]
        %v290 = vld [vmem:[#allocation2 + $0x60] sm:$0xff]
        %v291 = vld [vmem:[#allocation2 + $0x68] sm:$0xff]
        %v292 = vld [vmem:[#allocation2 + $0x70] sm:$0xff]
        %v293 = vld [vmem:[#allocation2 + $0x78] sm:$0xff]
        %294 = vmatprep.subr.mxu0 0.0
        %295 = vmatpush1.msra.mxu0 %v293
        %296 = vmatprep.subr.mxu0 0.0
        %297 = vmatpush1.msra.mxu0 %v292
        %298 = vmatprep.subr.mxu0 0.0
        %299 = vmatpush1.msra.mxu0 %v291
        %300 = vmatprep.subr.mxu0 0.0
        %301 = vmatpush1.msra.mxu0 %v290
        %302 = vmatprep.subr.mxu0 0.0
        %303 = vmatpush1.msra.mxu0 %v289
        %304 = vmatprep.subr.mxu0 0.0
        %305 = vmatpush1.msra.mxu0 %v288
        %306 = vmatprep.subr.mxu0 0.0
        %307 = vmatpush1.msra.mxu0 %v287
        %308 = vmatprep.subr.mxu0 0.0
        %309 = vmatpush1.msra.mxu0 %v286
        %310 = vmatprep.subr.mxu0 0.0
        %311 = vmatpush1.msra.mxu0 %v285
        %312 = vmatprep.subr.mxu0 0.0
        %313 = vmatpush1.msra.mxu0 %v284
        %314 = vmatprep.subr.mxu0 0.0
        %315 = vmatpush1.msra.mxu0 %v283
        %316 = vmatprep.subr.mxu0 0.0
        %317 = vmatpush1.msra.mxu0 %v282
        %318 = vmatprep.subr.mxu0 0.0
        %319 = vmatpush1.msra.mxu0 %v281
        %320 = vmatprep.subr.mxu0 0.0
        %321 = vmatpush1.msra.mxu0 %v280
        %322 = vmatprep.subr.mxu0 0.0
        %323 = vmatpush1.msra.mxu0 %v279
        %324 = vmatprep.subr.mxu0 0.0
        %325 = vmatpush1.msra.mxu0 %v278
        %326 = vmatprep.subr.mxu0 0.0
        %327 = vmatpush2.msra.mxu0 0.0
        %328 = vmatprep.subr.mxu0 0.0
        %329 = vmatpush2.msra.mxu0 0.0
        %330 = vmatprep.subr.mxu0 0.0
        %331 = vmatpush2.msra.mxu0 0.0
        %332 = vmatprep.subr.mxu0 0.0
        %333 = vmatpush2.msra.mxu0 0.0
        %334 = vmatprep.subr.mxu0 0.0
        %335 = vmatpush2.msra.mxu0 0.0
        %336 = vmatprep.subr.mxu0 0.0
        %337 = vmatpush2.msra.mxu0 0.0
        %338 = vmatprep.subr.mxu0 0.0
        %339 = vmatpush2.msra.mxu0 0.0
        %340 = vmatprep.subr.mxu0 0.0
        %341 = vmatpush2.msra.mxu0 0.0
        %342 = vmatprep.subr.mxu0 0.0
        %343 = vmatpush2.msra.mxu0 0.0
        %344 = vmatprep.subr.mxu0 0.0
        %345 = vmatpush2.msra.mxu0 0.0
        %346 = vmatprep.subr.mxu0 0.0
        %347 = vmatpush2.msra.mxu0 0.0
        %348 = vmatprep.subr.mxu0 0.0
        %349 = vmatpush2.msra.mxu0 0.0
        %350 = vmatprep.subr.mxu0 0.0
        %351 = vmatpush2.msra.mxu0 0.0
        %352 = vmatprep.subr.mxu0 0.0
        %353 = vmatpush2.msra.mxu0 0.0
        %354 = vmatprep.subr.mxu0 0.0
        %355 = vmatpush2.msra.mxu0 0.0
        %356 = vmatprep.subr.mxu0 0.0
        %357 = vmatpush2.msra.mxu0 0.0
        %358 = vmatprep.mubr.f32.mxu0 0.0
        %359 = vmatmul.mubr.f32.gmra.mxu0 %v276
        %v360 = vpop.f32.mrf.mxu0
        %v361 = vadd.f32 0.0, %v360
        %v362 = vpop.f32.mrf.mxu0
        %363 = vmatprep.mubr.f32.mxu0 0.0
        %364 = vmatmul.mubr.f32.gmra.mxu0 %v277
        %v365 = vpop.f32.mrf.mxu0
        %v366 = vadd.f32 0.0, %v365
        %v367 = vpop.f32.mrf.mxu0
        %368 = vdwg.mxu0
        %369 = vadd.xlane.f32.xlu0 %v361
        %v370 = vpop.xlane.xlu0 %369
        %371 = vadd.xlane.f32.xlu0 %v366
        %v372 = vpop.xlane.xlu0 %371
        %v373 = vrcp.pop 128.0
        %v374 = vmul.f32 %v370, %v373
        %v375 = vmul.f32 %v372, %v373
        %v376 = vmul.f32 %v361, %v361
        %v377 = vmul.f32 %v366, %v366
        %378 = vadd.xlane.f32.xlu0 %v376
        %v379 = vpop.xlane.xlu0 %378
        %380 = vadd.xlane.f32.xlu0 %v377
        %v381 = vpop.xlane.xlu0 %380
        %v382 = vmul.f32 %v379, %v373
        %v383 = vmul.f32 %v381, %v373
        %v384 = vmul.f32 %v374, %v374
        %v385 = vmul.f32 %v375, %v375
        %v386 = vsub.f32 %v382, %v384
        %v387 = vsub.f32 %v383, %v385
        %v388 = vmax.f32 %v386, 0.0
        %v389 = vmax.f32 %v387, 0.0
        %v390 = vsub.f32 %v361, %v374
        %v391 = vsub.f32 %v366, %v375
        %v392 = vadd.f32 %v388, 1e-12
        %v393 = vadd.f32 %v389, 1e-12
        %v394 = vrsqrt.pop %v392
        %v395 = vrsqrt.pop %v393
        %v396 = vmul.f32 %v390, %v394
        %v397 = vmul.f32 %v391, %v395
        %v398 = vld [vmem:[%s2] sm:$0x1]
        %v400 = vlaneseq
        %v401 = vshrl.u32 %v400, 7
        %v402 = vsub.s32 0, %v401
        %v403 = vrot.slane %v398, %v402
        %v405 = vmul.f32 %v396, %v403
        %v406 = vmul.f32 %v397, %v403
        %v407 = vld [vmem:[%s3] sm:$0x1]
        %v409 = vlaneseq
        %v410 = vshrl.u32 %v409, 7
        %v411 = vsub.s32 0, %v410
        %v412 = vrot.slane %v407, %v411
        %v414 = vadd.f32 %v405, %v412
        %v415 = vadd.f32 %v406, %v412
        %416 = vst [vmem:[%s230] sm:$0xff] %v414
        %417 = vst [vmem:[%s230 + $0x8] sm:$0xff] %v415
        %s418 = sand.u32 %s132, 1
        %s419 = scalar_lea.sflag [#allocation4], %s418
        %s420 = sand.u32 %s132, 1
        %s421 = smul.addr %s420, 16
        %s422 = scalar_lea.vmem [#allocation5], %s421
        // Predicated region
        $region41: #{tpu_custom_call.1} parent=35 // pred_check
          %p423 = pneg %p142
        $region42: #{tpu_custom_call.1} parent=35 // pred_check_branch
          %425 = sbr.rel (%p423) target = $region44
        $region43: #{tpu_custom_call.1} parent=35 // pred_region
          %s426 = smul.u32 2, %s24
          %s428 = ssub.s32 256, 256
          %429 = vsyncadd %s419, %s428
          %s430 = smul.addr %s23, 2
          %s431 = sadd.s32 %s426, %s430
          %s432 = smul.addr %s431, 128
          %s433 = scalar_lea.hbm %s4, %s432
          %s434 = sshll.u32 %s422, 4
          %s435 = int_to_ptr.vmem [resolvable:$true] %s434
          %440 = dma.vmem_to_hbm [thread:$0]  %s435, 256, %s433, %s419, 128, 128, 8
        $region44: #{tpu_custom_call.1} parent=35 // pred_fallthru
          _
      $region36: #{tpu_custom_call.1} parent=5 // pred_fallthru
        _
      %p441 = scmp.le.s32.totalorder 2, %s14
      // Predicated region
      $region45: #{tpu_custom_call.1} parent=5 // pred_check
        %p442 = pneg %p441
      $region46: #{tpu_custom_call.1} parent=5 // pred_check_branch
        %444 = sbr.rel (%p442) target = $region48
      $region47: #{tpu_custom_call.1} parent=5 // pred_region
        %s445 = ssub.s32 %s14, 2
        // Predicated region
        $region49: #{tpu_custom_call.1} parent=47 // pred_check
          %p446 = pneg %p148
        $region50: #{tpu_custom_call.1} parent=47 // pred_check_branch
          %448 = sbr.rel (%p446) target = $region52
        $region51: #{tpu_custom_call.1} parent=47 // pred_region
          %s449 = sand.u32 %s133, 1
          %s450 = scalar_lea.sflag [#allocation4], %s449
          %s451 = sand.u32 %s133, 1
          %s452 = smul.addr %s451, 16
          %s453 = scalar_lea.vmem [#allocation5], %s452
          %454 = dma.done %s450, 256
        $region52: #{tpu_custom_call.1} parent=47 // pred_fallthru
          _
      $region48: #{tpu_custom_call.1} parent=5 // pred_fallthru
        _
    $region6: #{tpu_custom_call.1} parent=1 // loop_footer
      %s18 = sadd.s32 1, %s14
    $region7: #{tpu_custom_call.1} parent=1 // loop_footer_branch
      %13 = sbr.rel target = $region3
    $region8: #{tpu_custom_call.1} parent=1 // loop_exit
      _
    %455 = vsyncpa [#allocation3], 1
    %s456 = scalar_lea.sflag [#allocation3], 1
    %457 = vsyncpa %s456, 1
    %458 = vsyncpa [#allocation4], 1
    %s459 = scalar_lea.sflag [#allocation4], 1
    %460 = vsyncpa %s459, 1

</llo_original>
